<compile_context>
chip_gen: v7x
topology: tpu7x:2x2x1
jax: 0.10.0
libtpu: 0.0.40
codegen_flags: <defaults>
</compile_context>

<pallas_src>
import numpy as np

import jax
import jax.numpy as jnp
from jax.experimental import pallas as pl
from jax.experimental.pallas import tpu as pltpu


def _bias_copy_kernel(emb_ref, o_ref, copy_sem):
    # Single HBM -> HBM DMA of the whole table. No VMEM staging, no grid steps.
    cp = pltpu.make_async_copy(emb_ref, o_ref, copy_sem)
    cp.start()
    cp.wait()


def broadcast_position_biases(x, emb):
    """Pallas implementation of BroadcastPositionBiases.forward.

    x:   (B, S, D)        -- only its shape is used (as in the PyTorch module).
    emb: (32, embed_dim)  -- the single learned table.
    Returns the position bias of shape (S, D) == (32, embed_dim), emb's dtype.
    """
    spatial = x.shape[1:-1]
    n_dim = len(spatial)
    # TODO(synk): n_dim > 1 is not implemented; the PyTorch module itself only
    # allocates one emb table (range(1)) and would IndexError for n_dim > 1.
    assert n_dim == 1, "BroadcastPositionBiases defines a single positional table"

    embed_dim = x.shape[-1]
    L = int(np.prod(spatial))
    # The module's final `.view(prod(shape), embed_dim)` requires
    # prod(shape) * embed_dim == 32 * embed_dim, i.e. L == 32 and the embedding
    # width must match the table's — enforce the same constraint here so no
    # wrapper-side reshape (and no hidden relayout) is ever needed.
    assert L == emb.shape[0] and embed_dim == emb.shape[1], (
        f"forward requires spatial size {emb.shape[0]} and embed_dim "
        f"{emb.shape[1]}, got spatial={L}, embed_dim={embed_dim}")

    bytes_accessed = 2 * emb.size * emb.dtype.itemsize  # read + write

    out = pl.pallas_call(
        _bias_copy_kernel,
        out_shape=jax.ShapeDtypeStruct((L, embed_dim), emb.dtype),
        in_specs=[pl.BlockSpec(memory_space=pl.ANY)],
        out_specs=pl.BlockSpec(memory_space=pl.ANY),
        scratch_shapes=[pltpu.SemaphoreType.DMA(())],
        cost_estimate=pl.CostEstimate(
            flops=0,
            transcendentals=0,
            bytes_accessed=bytes_accessed,
        ),
    )(emb)
    return out


def _reference(x, emb):
    """Pure-JAX transcription of the PyTorch forward (n_dim == 1 path)."""
    shape = x.shape[1:-1]
    n_dim = len(shape)
    embed_dim = x.shape[-1]
    chunk_sizes = [embed_dim // n_dim + (i < embed_dim % n_dim) for i in range(n_dim)]
    assert sum(chunk_sizes) == embed_dim
    embs = [emb]
    out = []
    for i in range(n_dim):
        e = embs[i]
        e = e.reshape((1,) + (1,) * i + (shape[i],) + (1,) * (n_dim - i - 1) + (-1,))
        e = jnp.broadcast_to(e, (1,) + tuple(shape) + (e.shape[-1],))
        out.append(e)
    out = jnp.concatenate(out, axis=-1)
    return out.reshape(int(np.prod(shape)), embed_dim)


if __name__ == "__main__":
    # Shapes consistent with the module: the table has 32 rows, so the (single)
    # spatial dim must be 32; embed_dim chosen lane-dense (128).
    batch, seq, embed_dim = 2, 32, 128
    key = jax.random.PRNGKey(0)
    kx, ke = jax.random.split(key)

    x = jax.random.normal(kx, (batch, seq, embed_dim), dtype=jnp.float32)
    emb = 0.02 * jax.random.normal(ke, (32, embed_dim), dtype=jnp.float32)

    out = broadcast_position_biases(x, emb)
    out = jax.block_until_ready(out)

    ref = _reference(x, emb)
    assert out.shape == (seq, embed_dim), out.shape
    assert out.dtype == emb.dtype, out.dtype
    assert jnp.array_equal(out, ref), "mismatch vs reference"

    print("KERNEL_OK")
</pallas_src>

<mosaic_0001>
module attributes {stable_mosaic.version = 11 : i64} {
  func.func @_bias_copy_kernel(%arg0: memref<32x128xf32, #tpu.memory_space<any>>, %arg1: memref<32x128xf32, #tpu.memory_space<any>>, %arg2: memref<!tpu.dma_semaphore, #tpu.memory_space<semaphore_mem>>) attributes {dimension_semantics = [], scalar_prefetch = 0 : i64, scratch_operands = 1 : i64, tpu.core_type = #tpu.core_type<tc>} {
    tpu.enqueue_dma source(%arg0 : memref<32x128xf32, #tpu.memory_space<any>>) target(%arg1 : memref<32x128xf32, #tpu.memory_space<any>>) target_semaphore(%arg2 : memref<!tpu.dma_semaphore, #tpu.memory_space<semaphore_mem>>)
    tpu.wait_dma2 semaphore(%arg2 : memref<!tpu.dma_semaphore, #tpu.memory_space<semaphore_mem>>) src(%arg0 : memref<32x128xf32, #tpu.memory_space<any>>) dst(%arg1 : memref<32x128xf32, #tpu.memory_space<any>>)
    return
  }
}

</mosaic_0001>

<llo_original>
// kernel: tpu_custom_call.1
$region0: #{tpu_custom_call.1}
  #allocation0 [shape = 'u32[]', space=smem, size = 0x4, offset = 0x4, fixed_abs, tag = 'smem constant byte address 0x4 - core index']
  #allocation1 [shape = 'u32[144,128]{1,0:T(1,128)}', space=vmem, size = 0x12000, scoped, tag = 'internal scratch']
  #allocation2 [shape = 's32[1]{0}', space=sflag, size = 0x4, scoped, tag = 'scratch operand']
  #allocation3 [shape = 's32[]', space=sflag, size = 0x4, offset = 0, fixed_abs, tag = 'sflag constant byte address 0x0 - dummy sync flag']
  #allocation4 [shape = 'u32[0]{0}', space=smem, size = 0, offset = 0, fixed_abs, tag = 'smem constant byte address 0x0 - null']
  %s0 = inlined_call_operand.hbm [shape: f32[32,128], index: 0, kind: input, shape index: {}]
  %s1 = inlined_call_operand.hbm [shape: f32[32,128], index: 1, kind: output, shape index: {}]
  %s2 = sld [smem:[#allocation0]]
  $region2: #{tpu_custom_call.1} parent=0
    _
  %s4 = ssub.s32 1, %s2
  %s5 = scalar_select 0, %s4, %s2
  %s7 = sshll.u32 1, 14
  %s8 = sxor.u32 4294967295, %s7
  %s11 = sshll.u32 3, 24
  %s12 = sxor.u32 4294967295, %s11
  %s13 = sand.u32 0, %s12
  %s15 = sor.u32 %s13, 0
  %18 = dma.general %s0, 512, %s1, [#allocation2], [#allocation3], [#allocation4], %s15, 0
  %s19 = smul.u32 32, 1
  %s20 = sshll.u32 %s19, 4
  %21 = dma.done [#allocation2], %s20
  %22 = vsyncmov [#allocation2]
  %s23 = vpop.sfrf %22
  %p24 = scmp.eq.s32.totalorder %s23, 0
  %p25 = pneg %p24
  %27 = shalt.err (%p25)

</llo_original>
